<compile_context>
chip_gen: v5e
topology: v5e:2x2
jax: 0.10.0
libtpu: 0.0.40
codegen_flags: <defaults>
</compile_context>

<pallas_src>
import functools

import jax
import jax.numpy as jnp
from jax.experimental import pallas as pl
from jax.experimental.pallas import tpu as pltpu


def _round_up(x, m):
    return (x + m - 1) // m * m


def _pick_tile(n):
    """Row-tile size: large tiles, lane-aligned output blocks, >=2 grid steps."""
    if n <= 128:
        # Single tile: (1, tn) output block equals the full padded array dims.
        return _round_up(max(n, 8), 8)
    # Multiple of 128 so the lane-dense (1, tn) output block is aligned; aim for
    # at least 2 grid steps (v7x megacore) and at most 1024 rows per step.
    half = max(128, (n // 2 // 128) * 128)
    return min(1024, half)


def ged_matrix_kernel(e1_ref, e2_ref, w2d_ref, w1r_ref, b1_ref,
                      w2_ref, b2_ref, w3r_ref, b3_ref, out_ref):
    """One grid step handles a tn-row tile.

    e1_ref, e2_ref : (tn, d)    row tiles of the two embeddings
    w2d_ref        : (d, k*d)   bilinear weight, W[q,a,b] -> w2d[a, q*d+b]
    w1r_ref        : (k*d, 2k)  MLP layer-1 weight with each row repeated d times
                                (folds the per-q reduction:  feats@w1 == prod@w1r)
    w2_ref, b2_ref : (2k, k), (1, k)
    w3r_ref, b3_ref: (1, k), (1, 1)   final Linear(k,1) as a row vector
    out_ref        : (1, tn)    lane-dense output tile
    """
    cdt = w2d_ref.dtype
    e1 = e1_ref[...].astype(cdt)                                   # (tn, d)
    e2 = e2_ref[...].astype(cdt)                                   # (tn, d)
    k = w3r_ref.shape[1]

    # Fused bilinear term: t[i, q*d + b] = sum_a e1[i, a] * W[q, a, b]
    t = jnp.dot(e1, w2d_ref[...], preferred_element_type=jnp.float32)   # (tn, k*d)
    prod = t * jnp.tile(e2, (1, k))                                      # (tn, k*d)

    # MLP layer 1 (also completes the sum over b, since w1's rows were repeated):
    h = jnp.dot(prod.astype(w1r_ref.dtype), w1r_ref[...],
                preferred_element_type=jnp.float32) + b1_ref[...]        # (tn, 2k)
    h = jnp.maximum(h, 0.0)
    # MLP layer 2:
    h = jnp.dot(h, w2_ref[...], preferred_element_type=jnp.float32) + b2_ref[...]
    h = jnp.maximum(h, 0.0)                                              # (tn, k)

    # Final Linear(k, 1): VPU multiply + lane reduce (avoid an N=1 MXU matmul).
    out_col = jnp.sum(h * w3r_ref[...], axis=-1, keepdims=True) + b3_ref[...]  # (tn, 1)

    # Lane-dense store: output block is (1, tn).
    out_ref[...] = out_col.reshape(out_ref.shape).astype(out_ref.dtype)


@functools.partial(jax.jit, static_argnames=("tn", "compute_dtype"))
def ged_matrix_forward(e1, e2, W, w1, b1, w2, b2, w3, b3, *,
                       tn=None, compute_dtype=jnp.float32):
    n, d = e1.shape
    k = W.shape[0]
    assert e2.shape == (n, d) and W.shape == (k, d, d)

    if tn is None:
        tn = _pick_tile(n)
    assert tn % 8 == 0 and (tn % 128 == 0 or tn >= n), "bad tile size"

    n_pad = _round_up(n, tn)
    cdt = jnp.dtype(compute_dtype)

    # All layout plumbing happens here (free), not in the kernel.
    e1p = e1.astype(cdt)
    e2p = e2.astype(cdt)
    if n_pad != n:
        pad = n_pad - n
        e1p = jnp.pad(e1p, ((0, pad), (0, 0)))
        e2p = jnp.pad(e2p, ((0, pad), (0, 0)))
    w2d = jnp.transpose(W, (1, 0, 2)).reshape(d, k * d).astype(cdt)   # (d, k*d)
    w1r = jnp.repeat(w1, d, axis=0).astype(cdt)                        # (k*d, 2k)
    w3row = w3.reshape(1, k).astype(jnp.float32)                       # (1, k)

    const = lambda shape: pl.BlockSpec(shape, lambda i: (0, 0))        # resident weights
    grid_spec = pltpu.PrefetchScalarGridSpec(
        num_scalar_prefetch=0,
        grid=(n_pad // tn,),
        in_specs=[
            pl.BlockSpec((tn, d), lambda i: (i, 0)),      # e1 tile
            pl.BlockSpec((tn, d), lambda i: (i, 0)),      # e2 tile
            const((d, k * d)),                            # fused bilinear weight
            const((k * d, 2 * k)), const((1, 2 * k)),     # mlp layer 1 (row-repeated)
            const((2 * k, k)), const((1, k)),             # mlp layer 2
            const((1, k)), const((1, 1)),                 # mlp layer 3 (row vector)
        ],
        out_specs=pl.BlockSpec((1, tn), lambda i: (0, i)),   # lane-dense output
    )
    out_row = pl.pallas_call(
        ged_matrix_kernel,
        out_shape=jax.ShapeDtypeStruct((1, n_pad), jnp.float32),
        grid_spec=grid_spec,
        compiler_params=pltpu.CompilerParams(dimension_semantics=("parallel",)),
    )(e1p, e2p, w2d, w1r, b1, w2, b2, w3row, b3)
    return out_row[0, :n].reshape(n, 1)


def init_params(key, d, k):
    """Deterministic synthetic parameters with the module's shapes."""
    ks = jax.random.split(key, 7)

    def xavier(key, shape, fan_in, fan_out):
        bound = jnp.sqrt(6.0 / (fan_in + fan_out))
        return jax.random.uniform(key, shape, jnp.float32, -bound, bound)

    # weight_matrix: (k, d, d), xavier_uniform (fan as torch computes for 3-D)
    W = xavier(ks[0], (k, d, d), d * d, k * d)
    # Linear weights stored transposed: (in, out); biases as (1, out).
    w1 = xavier(ks[1], (k, 2 * k), k, 2 * k)
    b1 = 0.01 * jax.random.normal(ks[2], (1, 2 * k), jnp.float32)
    w2 = xavier(ks[3], (2 * k, k), 2 * k, k)
    b2 = 0.01 * jax.random.normal(ks[4], (1, k), jnp.float32)
    w3 = xavier(ks[5], (k, 1), k, 1)
    b3 = 0.01 * jax.random.normal(ks[6], (1, 1), jnp.float32)
    return W, w1, b1, w2, b2, w3, b3


def reference_forward(e1, e2, W, w1, b1, w2, b2, w3, b3):
    feats = jnp.einsum('ia,qab,ib->iq', e1, W, e2)
    h = jax.nn.relu(feats @ w1 + b1)
    h = jax.nn.relu(h @ w2 + b2)
    return h @ w3 + b3


if __name__ == "__main__":
    d, k = 32, 8
    key = jax.random.PRNGKey(0)
    k_e1, k_e2, k_p = jax.random.split(key, 3)
    params = init_params(k_p, d, k)

    # f32 path: n=256 -> tn=128, grid=2 (keeps both v7x TensorCores busy).
    n = 256
    e1 = jax.random.normal(k_e1, (n, d), jnp.float32)
    e2 = jax.random.normal(k_e2, (n, d), jnp.float32)
    out = ged_matrix_forward(e1, e2, *params)
    jax.block_until_ready(out)
    ref = reference_forward(e1, e2, *params)
    assert out.shape == (n, 1)
    assert jnp.allclose(out, ref, atol=1e-4, rtol=1e-4), \
        float(jnp.max(jnp.abs(out - ref)))

    # bf16 MXU feed (f32 accumulation) + ragged n exercising the padding path.
    n2 = 200
    e1b = jax.random.normal(jax.random.fold_in(key, 1), (n2, d), jnp.float32)
    e2b = jax.random.normal(jax.random.fold_in(key, 2), (n2, d), jnp.float32)
    out_bf = ged_matrix_forward(e1b, e2b, *params, compute_dtype=jnp.bfloat16)
    jax.block_until_ready(out_bf)
    ref_bf = reference_forward(e1b, e2b, *params)
    assert out_bf.shape == (n2, 1)
    err_bf = float(jnp.max(jnp.abs(out_bf - ref_bf)))
    assert err_bf < 0.1 * (1.0 + float(jnp.max(jnp.abs(ref_bf)))), err_bf

    print("KERNEL_OK")
</pallas_src>

<mosaic_0001>
module attributes {stable_mosaic.version = 11 : i64} {
  func.func @ged_matrix_kernel(%arg0: i32, %arg1: memref<128x32xf32, #tpu.memory_space<vmem>>, %arg2: memref<128x32xf32, #tpu.memory_space<vmem>>, %arg3: memref<32x256xf32, #tpu.memory_space<vmem>>, %arg4: memref<256x16xf32, #tpu.memory_space<vmem>>, %arg5: memref<1x16xf32, #tpu.memory_space<vmem>>, %arg6: memref<16x8xf32, #tpu.memory_space<vmem>>, %arg7: memref<1x8xf32, #tpu.memory_space<vmem>>, %arg8: memref<1x8xf32, #tpu.memory_space<vmem>>, %arg9: memref<1x1xf32, #tpu.memory_space<vmem>>, %arg10: memref<1x128xf32, #tpu.memory_space<vmem>>) attributes {dimension_semantics = [#tpu.dimension_semantics<parallel>], iteration_bounds = array<i64: 2>, scalar_prefetch = 0 : i64, scratch_operands = 0 : i64, tpu.core_type = #tpu.core_type<tc>, window_params = [{transform_indices = @transform_0, window_bounds = array<i64: 128, 32>}, {transform_indices = @transform_1, window_bounds = array<i64: 128, 32>}, {pipeline_mode = #tpu.pipeline_mode<synchronous>, transform_indices = @transform_2, window_bounds = array<i64: 32, 256>}, {pipeline_mode = #tpu.pipeline_mode<synchronous>, transform_indices = @transform_3, window_bounds = array<i64: 256, 16>}, {pipeline_mode = #tpu.pipeline_mode<synchronous>, transform_indices = @transform_4, window_bounds = array<i64: 1, 16>}, {pipeline_mode = #tpu.pipeline_mode<synchronous>, transform_indices = @transform_5, window_bounds = array<i64: 16, 8>}, {pipeline_mode = #tpu.pipeline_mode<synchronous>, transform_indices = @transform_6, window_bounds = array<i64: 1, 8>}, {pipeline_mode = #tpu.pipeline_mode<synchronous>, transform_indices = @transform_7, window_bounds = array<i64: 1, 8>}, {pipeline_mode = #tpu.pipeline_mode<synchronous>, transform_indices = @transform_8, window_bounds = array<i64: 1, 1>}, {transform_indices = @transform_9, window_bounds = array<i64: 1, 128>}]} {
    %c0 = arith.constant 0 : index
    %c0_0 = arith.constant 0 : index
    %0 = vector.load %arg1[%c0, %c0_0] : memref<128x32xf32, #tpu.memory_space<vmem>>, vector<128x32xf32>
    %c0_1 = arith.constant 0 : index
    %c0_2 = arith.constant 0 : index
    %1 = vector.load %arg2[%c0_1, %c0_2] : memref<128x32xf32, #tpu.memory_space<vmem>>, vector<128x32xf32>
    %c0_3 = arith.constant 0 : index
    %c0_4 = arith.constant 0 : index
    %2 = vector.load %arg3[%c0_3, %c0_4] : memref<32x256xf32, #tpu.memory_space<vmem>>, vector<32x256xf32>
    %cst = arith.constant dense<0.000000e+00> : vector<128x256xf32>
    %3 = tpu.matmul %0, %2, %cst {dimension_numbers = #tpu.dot_dimension_numbers<[1], [0], [0], [1], [0, 0, 1, 1], [], []>} : vector<128x32xf32>, vector<32x256xf32>, vector<128x256xf32> -> vector<128x256xf32>
    %4 = tpu.concatenate %1, %1, %1, %1, %1, %1, %1, %1 in 1 : vector<128x32xf32>, vector<128x32xf32>, vector<128x32xf32>, vector<128x32xf32>, vector<128x32xf32>, vector<128x32xf32>, vector<128x32xf32>, vector<128x32xf32> -> vector<128x256xf32>
    %5 = arith.mulf %3, %4 : vector<128x256xf32>
    %c0_5 = arith.constant 0 : index
    %c0_6 = arith.constant 0 : index
    %6 = vector.load %arg4[%c0_5, %c0_6] : memref<256x16xf32, #tpu.memory_space<vmem>>, vector<256x16xf32>
    %cst_7 = arith.constant dense<0.000000e+00> : vector<128x16xf32>
    %7 = tpu.matmul %5, %6, %cst_7 {dimension_numbers = #tpu.dot_dimension_numbers<[1], [0], [0], [1], [0, 0, 1, 1], [], []>} : vector<128x256xf32>, vector<256x16xf32>, vector<128x16xf32> -> vector<128x16xf32>
    %c0_8 = arith.constant 0 : index
    %c0_9 = arith.constant 0 : index
    %8 = vector.load %arg5[%c0_8, %c0_9] : memref<1x16xf32, #tpu.memory_space<vmem>>, vector<1x16xf32>
    %9 = vector.broadcast %8 : vector<1x16xf32> to vector<128x16xf32>
    %10 = arith.addf %7, %9 : vector<128x16xf32>
    %cst_10 = arith.constant 0.000000e+00 : f32
    %11 = vector.broadcast %cst_10 : f32 to vector<128x16xf32>
    %12 = arith.maximumf %10, %11 : vector<128x16xf32>
    %c0_11 = arith.constant 0 : index
    %c0_12 = arith.constant 0 : index
    %13 = vector.load %arg6[%c0_11, %c0_12] : memref<16x8xf32, #tpu.memory_space<vmem>>, vector<16x8xf32>
    %cst_13 = arith.constant dense<0.000000e+00> : vector<128x8xf32>
    %14 = tpu.matmul %12, %13, %cst_13 {dimension_numbers = #tpu.dot_dimension_numbers<[1], [0], [0], [1], [0, 0, 1, 1], [], []>} : vector<128x16xf32>, vector<16x8xf32>, vector<128x8xf32> -> vector<128x8xf32>
    %c0_14 = arith.constant 0 : index
    %c0_15 = arith.constant 0 : index
    %15 = vector.load %arg7[%c0_14, %c0_15] : memref<1x8xf32, #tpu.memory_space<vmem>>, vector<1x8xf32>
    %16 = vector.broadcast %15 : vector<1x8xf32> to vector<128x8xf32>
    %17 = arith.addf %14, %16 : vector<128x8xf32>
    %cst_16 = arith.constant 0.000000e+00 : f32
    %18 = vector.broadcast %cst_16 : f32 to vector<128x8xf32>
    %19 = arith.maximumf %17, %18 : vector<128x8xf32>
    %c0_17 = arith.constant 0 : index
    %c0_18 = arith.constant 0 : index
    %20 = vector.load %arg8[%c0_17, %c0_18] : memref<1x8xf32, #tpu.memory_space<vmem>>, vector<1x8xf32>
    %21 = vector.broadcast %20 : vector<1x8xf32> to vector<128x8xf32>
    %22 = arith.mulf %19, %21 : vector<128x8xf32>
    %cst_19 = arith.constant dense<0.000000e+00> : vector<128xf32>
    %23 = vector.multi_reduction <add>, %22, %cst_19 [1] : vector<128x8xf32> to vector<128xf32>
    %24 = vector.shape_cast %23 : vector<128xf32> to vector<128x1xf32>
    %c0_20 = arith.constant 0 : index
    %c0_21 = arith.constant 0 : index
    %25 = vector.load %arg9[%c0_20, %c0_21] : memref<1x1xf32, #tpu.memory_space<vmem>>, vector<1x1xf32>
    %26 = vector.broadcast %25 : vector<1x1xf32> to vector<128x1xf32>
    %27 = arith.addf %24, %26 : vector<128x1xf32>
    %28 = vector.shape_cast %27 : vector<128x1xf32> to vector<1x128xf32>
    %c0_22 = arith.constant 0 : index
    %c0_23 = arith.constant 0 : index
    %29 = vector.load %arg10[%c0_22, %c0_23] : memref<1x128xf32, #tpu.memory_space<vmem>>, vector<1x128xf32>
    tpu.vector_store %arg10[%c0_22, %c0_23], %28 {strides = array<i32>} : memref<1x128xf32, #tpu.memory_space<vmem>>, vector<1x128xf32>,
    return
  }
  func.func @transform_0(%arg0: i32) -> (i32, i32) {
    %c0_i32 = arith.constant 0 : i32
    %c0_i32_0 = arith.constant 0 : i32
    return %arg0, %c0_i32 : i32, i32
  }
  func.func @transform_1(%arg0: i32) -> (i32, i32) {
    %c0_i32 = arith.constant 0 : i32
    %c0_i32_0 = arith.constant 0 : i32
    return %arg0, %c0_i32 : i32, i32
  }
  func.func @transform_2(%arg0: i32) -> (i32, i32) {
    %c0_i32 = arith.constant 0 : i32
    %c0_i32_0 = arith.constant 0 : i32
    %c0_i32_1 = arith.constant 0 : i32
    return %c0_i32, %c0_i32_0 : i32, i32
  }
  func.func @transform_3(%arg0: i32) -> (i32, i32) {
    %c0_i32 = arith.constant 0 : i32
    %c0_i32_0 = arith.constant 0 : i32
    %c0_i32_1 = arith.constant 0 : i32
    return %c0_i32, %c0_i32_0 : i32, i32
  }
  func.func @transform_4(%arg0: i32) -> (i32, i32) {
    %c0_i32 = arith.constant 0 : i32
    %c0_i32_0 = arith.constant 0 : i32
    %c0_i32_1 = arith.constant 0 : i32
    return %c0_i32, %c0_i32_0 : i32, i32
  }
  func.func @transform_5(%arg0: i32) -> (i32, i32) {
    %c0_i32 = arith.constant 0 : i32
    %c0_i32_0 = arith.constant 0 : i32
    %c0_i32_1 = arith.constant 0 : i32
    return %c0_i32, %c0_i32_0 : i32, i32
  }
  func.func @transform_6(%arg0: i32) -> (i32, i32) {
    %c0_i32 = arith.constant 0 : i32
    %c0_i32_0 = arith.constant 0 : i32
    %c0_i32_1 = arith.constant 0 : i32
    return %c0_i32, %c0_i32_0 : i32, i32
  }
  func.func @transform_7(%arg0: i32) -> (i32, i32) {
    %c0_i32 = arith.constant 0 : i32
    %c0_i32_0 = arith.constant 0 : i32
    %c0_i32_1 = arith.constant 0 : i32
    return %c0_i32, %c0_i32_0 : i32, i32
  }
  func.func @transform_8(%arg0: i32) -> (i32, i32) {
    %c0_i32 = arith.constant 0 : i32
    %c0_i32_0 = arith.constant 0 : i32
    %c0_i32_1 = arith.constant 0 : i32
    return %c0_i32, %c0_i32_0 : i32, i32
  }
  func.func @transform_9(%arg0: i32) -> (i32, i32) {
    %c0_i32 = arith.constant 0 : i32
    %c0_i32_0 = arith.constant 0 : i32
    return %c0_i32, %arg0 : i32, i32
  }
}

</mosaic_0001>

<llo_original>
// kernel: ged_matrix_forward.1
$region0: #{ged_matrix_forward.1}
  #allocation0 [shape = 'u32[]', space=smem, size = 0x4, offset = 0x4, fixed_abs, tag = 'smem constant byte address 0x4 - core index']
  #allocation1 [shape = 'u32[72,128]{1,0:T(1,128)}', space=vmem, size = 0x9000, scoped, tag = 'internal scratch']
  #allocation2 [shape = 'f32[1,1]{1,0:T(1,128)S(1)}', space=vmem, size = 0x200, scoped, tag = 'scoped memory for ged_matrix_forward.1']
  %s0 = inlined_call_operand.vmem [shape: f32[256,32], index: 0, kind: input, shape index: {}]
  %s1 = inlined_call_operand.vmem [shape: f32[256,32], index: 1, kind: input, shape index: {}]
  %s2 = inlined_call_operand.vmem [shape: f32[32,256], index: 2, kind: input, shape index: {}]
  %s3 = inlined_call_operand.vmem [shape: f32[256,16], index: 3, kind: input, shape index: {}]
  %s4 = inlined_call_operand.vmem [shape: f32[1,16], index: 4, kind: input, shape index: {}]
  %s5 = inlined_call_operand.vmem [shape: f32[16,8], index: 5, kind: input, shape index: {}]
  %s6 = inlined_call_operand.vmem [shape: f32[1,8], index: 6, kind: input, shape index: {}]
  %s7 = inlined_call_operand.vmem [shape: f32[1,8], index: 7, kind: input, shape index: {}]
  %s8 = inlined_call_operand.<no memory space> [shape: f32[1,1], index: 8, kind: input, shape index: {}]
  %s9 = inlined_call_operand.hbm [shape: f32[1,256], index: 9, kind: output, shape index: {}]
  %s10 = sld [smem:[#allocation0]]
  $region69: #{ged_matrix_forward.1} parent=0
    _
  %s12 = ssub.s32 1, %s10
  %s13 = scalar_select 0, %s12, %s10
  %v14 = vstv %s8
  %15 = vst [vmem:[#allocation2] sm:$0x1] %v14
  $region1: #{ged_matrix_forward.1} parent=0
    #allocation3 [shape = 'u8[1024]{0}', space=vmem, size = 0x400, scoped, tag = 'output window, operand 0']
    #allocation4 [shape = 's32[2]{0}', space=sflag, size = 0x8, scoped, tag = 'scoped memory for ged_matrix_forward.1']
    %16 = vsyncpa [#allocation4], 0
    %s17 = scalar_lea.sflag [#allocation4], 1
    %18 = vsyncpa %s17, 0
    loop: start=0, step=1, limit=4
    $region2: #{ged_matrix_forward.1} parent=1 // loop_pre_header
      _
    $region3: #{ged_matrix_forward.1} parent=1 // loop_header
      %s20 = sphi 0, %s24
      %p21 = scmp.ge.s32.totalorder %s20, 4
      %s30 = sphi 0, %s32
      %s33 = sphi 0, %s30
      %s34 = sphi 0, %s33
      %s50 = sphi 0, %s34
      %s56 = sphi 0, %s58
      %s59 = sphi 0, %s56
      %s60 = sphi 0, %s59
      %s76 = sphi 0, %s60
      %s80 = sphi 0, %s80
      %s82 = sphi 0, %s80
      %s83 = sphi 0, %s82
      %s97 = sphi 0, %s83
      %s101 = sphi 0, %s101
      %s103 = sphi 0, %s101
      %s104 = sphi 0, %s103
      %s118 = sphi 0, %s104
      %s122 = sphi 0, %s122
      %s124 = sphi 0, %s122
      %s125 = sphi 0, %s124
      %s139 = sphi 0, %s125
      %s143 = sphi 0, %s143
      %s145 = sphi 0, %s143
      %s146 = sphi 0, %s145
      %s160 = sphi 0, %s146
      %s164 = sphi 0, %s164
      %s166 = sphi 0, %s164
      %s167 = sphi 0, %s166
      %s181 = sphi 0, %s167
      %s185 = sphi 0, %s185
      %s187 = sphi 0, %s185
      %s188 = sphi 0, %s187
      %s202 = sphi 0, %s188
      %s206 = sphi 0, %s206
      %s208 = sphi 0, %s206
      %s209 = sphi 0, %s208
      %s223 = sphi 0, %s209
      %s229 = sphi 0, %s231
      %s232 = sphi 0, %s229
      %s233 = sphi 0, %s232
      %s249 = sphi 0, %s233
    $region4: #{ged_matrix_forward.1} parent=1 // loop_header_branch
      %23 = sbr.rel (%p21) target = $region8
    $region5: #{ged_matrix_forward.1} parent=1 // loop_body
      %s25 = ssub.s32 %s20, 1
      %s26 = ssub.s32 %s20, 2
      %s27 = sadd.s32 %s20, 1
      %s28 = ssub.s32 %s20, %s27
      %p29 = scmp.eq.s32.totalorder %s28, 0
      %s31 = sadd.s32 %s30, 1
      %s32 = scalar_select %p29, %s30, %s31
      %p35 = pneg %p29
      %p36 = scmp.eq.s32.totalorder %s20, 1
      %p37 = por %p35, %p36
      %p38 = scmp.ne.s32.totalorder %s30, %s33
      %p39 = scmp.eq.s32.totalorder %s20, 0
      %p40 = por %p38, %p39
      %p41 = scmp.ne.s32.totalorder %s30, %s33
      %p42 = scmp.eq.s32.totalorder %s25, 1
      %p43 = por %p41, %p42
      %p44 = scmp.ne.s32.totalorder %s33, %s34
      %p45 = scmp.eq.s32.totalorder %s25, 0
      %p46 = por %p44, %p45
      %p47 = scmp.ne.s32.totalorder %s33, %s34
      %p48 = scmp.eq.s32.totalorder %s26, 1
      %p49 = por %p47, %p48
      %p51 = scmp.ne.s32.totalorder %s34, %s50
      %p52 = scmp.eq.s32.totalorder %s26, 0
      %p53 = por %p51, %p52
      %s54 = ssub.s32 %s20, %s27
      %p55 = scmp.eq.s32.totalorder %s54, 0
      %s57 = sadd.s32 %s56, 1
      %s58 = scalar_select %p55, %s56, %s57
      %p61 = pneg %p55
      %p62 = scmp.eq.s32.totalorder %s20, 1
      %p63 = por %p61, %p62
      %p64 = scmp.ne.s32.totalorder %s56, %s59
      %p65 = scmp.eq.s32.totalorder %s20, 0
      %p66 = por %p64, %p65
      %p67 = scmp.ne.s32.totalorder %s56, %s59
      %p68 = scmp.eq.s32.totalorder %s25, 1
      %p69 = por %p67, %p68
      %p70 = scmp.ne.s32.totalorder %s59, %s60
      %p71 = scmp.eq.s32.totalorder %s25, 0
      %p72 = por %p70, %p71
      %p73 = scmp.ne.s32.totalorder %s59, %s60
      %p74 = scmp.eq.s32.totalorder %s26, 1
      %p75 = por %p73, %p74
      %p77 = scmp.ne.s32.totalorder %s60, %s76
      %p78 = scmp.eq.s32.totalorder %s26, 0
      %p79 = por %p77, %p78
      %s81 = sadd.s32 %s80, 1
      %p84 = scmp.eq.s32.totalorder %s20, 1
      %p85 = scmp.ne.s32.totalorder %s80, %s82
      %p86 = scmp.eq.s32.totalorder %s20, 0
      %p87 = por %p85, %p86
      %p88 = scmp.ne.s32.totalorder %s80, %s82
      %p89 = scmp.eq.s32.totalorder %s25, 1
      %p90 = por %p88, %p89
      %p91 = scmp.ne.s32.totalorder %s82, %s83
      %p92 = scmp.eq.s32.totalorder %s25, 0
      %p93 = por %p91, %p92
      %p94 = scmp.ne.s32.totalorder %s82, %s83
      %p95 = scmp.eq.s32.totalorder %s26, 1
      %p96 = por %p94, %p95
      %p98 = scmp.ne.s32.totalorder %s83, %s97
      %p99 = scmp.eq.s32.totalorder %s26, 0
      %p100 = por %p98, %p99
      %s102 = sadd.s32 %s101, 1
      %p105 = scmp.eq.s32.totalorder %s20, 1
      %p106 = scmp.ne.s32.totalorder %s101, %s103
      %p107 = scmp.eq.s32.totalorder %s20, 0
      %p108 = por %p106, %p107
      %p109 = scmp.ne.s32.totalorder %s101, %s103
      %p110 = scmp.eq.s32.totalorder %s25, 1
      %p111 = por %p109, %p110
      %p112 = scmp.ne.s32.totalorder %s103, %s104
      %p113 = scmp.eq.s32.totalorder %s25, 0
      %p114 = por %p112, %p113
      %p115 = scmp.ne.s32.totalorder %s103, %s104
      %p116 = scmp.eq.s32.totalorder %s26, 1
      %p117 = por %p115, %p116
      %p119 = scmp.ne.s32.totalorder %s104, %s118
      %p120 = scmp.eq.s32.totalorder %s26, 0
      %p121 = por %p119, %p120
      %s123 = sadd.s32 %s122, 1
      %p126 = scmp.eq.s32.totalorder %s20, 1
      %p127 = scmp.ne.s32.totalorder %s122, %s124
      %p128 = scmp.eq.s32.totalorder %s20, 0
      %p129 = por %p127, %p128
      %p130 = scmp.ne.s32.totalorder %s122, %s124
      %p131 = scmp.eq.s32.totalorder %s25, 1
      %p132 = por %p130, %p131
      %p133 = scmp.ne.s32.totalorder %s124, %s125
      %p134 = scmp.eq.s32.totalorder %s25, 0
      %p135 = por %p133, %p134
      %p136 = scmp.ne.s32.totalorder %s124, %s125
      %p137 = scmp.eq.s32.totalorder %s26, 1
      %p138 = por %p136, %p137
      %p140 = scmp.ne.s32.totalorder %s125, %s139
      %p141 = scmp.eq.s32.totalorder %s26, 0
      %p142 = por %p140, %p141
      %s144 = sadd.s32 %s143, 1
      %p147 = scmp.eq.s32.totalorder %s20, 1
      %p148 = scmp.ne.s32.totalorder %s143, %s145
      %p149 = scmp.eq.s32.totalorder %s20, 0
      %p150 = por %p148, %p149
      %p151 = scmp.ne.s32.totalorder %s143, %s145
      %p152 = scmp.eq.s32.totalorder %s25, 1
      %p153 = por %p151, %p152
      %p154 = scmp.ne.s32.totalorder %s145, %s146
      %p155 = scmp.eq.s32.totalorder %s25, 0
      %p156 = por %p154, %p155
      %p157 = scmp.ne.s32.totalorder %s145, %s146
      %p158 = scmp.eq.s32.totalorder %s26, 1
      %p159 = por %p157, %p158
      %p161 = scmp.ne.s32.totalorder %s146, %s160
      %p162 = scmp.eq.s32.totalorder %s26, 0
      %p163 = por %p161, %p162
      %s165 = sadd.s32 %s164, 1
      %p168 = scmp.eq.s32.totalorder %s20, 1
      %p169 = scmp.ne.s32.totalorder %s164, %s166
      %p170 = scmp.eq.s32.totalorder %s20, 0
      %p171 = por %p169, %p170
      %p172 = scmp.ne.s32.totalorder %s164, %s166
      %p173 = scmp.eq.s32.totalorder %s25, 1
      %p174 = por %p172, %p173
      %p175 = scmp.ne.s32.totalorder %s166, %s167
      %p176 = scmp.eq.s32.totalorder %s25, 0
      %p177 = por %p175, %p176
      %p178 = scmp.ne.s32.totalorder %s166, %s167
      %p179 = scmp.eq.s32.totalorder %s26, 1
      %p180 = por %p178, %p179
      %p182 = scmp.ne.s32.totalorder %s167, %s181
      %p183 = scmp.eq.s32.totalorder %s26, 0
      %p184 = por %p182, %p183
      %s186 = sadd.s32 %s185, 1
      %p189 = scmp.eq.s32.totalorder %s20, 1
      %p190 = scmp.ne.s32.totalorder %s185, %s187
      %p191 = scmp.eq.s32.totalorder %s20, 0
      %p192 = por %p190, %p191
      %p193 = scmp.ne.s32.totalorder %s185, %s187
      %p194 = scmp.eq.s32.totalorder %s25, 1
      %p195 = por %p193, %p194
      %p196 = scmp.ne.s32.totalorder %s187, %s188
      %p197 = scmp.eq.s32.totalorder %s25, 0
      %p198 = por %p196, %p197
      %p199 = scmp.ne.s32.totalorder %s187, %s188
      %p200 = scmp.eq.s32.totalorder %s26, 1
      %p201 = por %p199, %p200
      %p203 = scmp.ne.s32.totalorder %s188, %s202
      %p204 = scmp.eq.s32.totalorder %s26, 0
      %p205 = por %p203, %p204
      %s207 = sadd.s32 %s206, 1
      %p210 = scmp.eq.s32.totalorder %s20, 1
      %p211 = scmp.ne.s32.totalorder %s206, %s208
      %p212 = scmp.eq.s32.totalorder %s20, 0
      %p213 = por %p211, %p212
      %p214 = scmp.ne.s32.totalorder %s206, %s208
      %p215 = scmp.eq.s32.totalorder %s25, 1
      %p216 = por %p214, %p215
      %p217 = scmp.ne.s32.totalorder %s208, %s209
      %p218 = scmp.eq.s32.totalorder %s25, 0
      %p219 = por %p217, %p218
      %p220 = scmp.ne.s32.totalorder %s208, %s209
      %p221 = scmp.eq.s32.totalorder %s26, 1
      %p222 = por %p220, %p221
      %p224 = scmp.ne.s32.totalorder %s209, %s223
      %p225 = scmp.eq.s32.totalorder %s26, 0
      %p226 = por %p224, %p225
      %s227 = ssub.s32 %s20, %s27
      %p228 = scmp.eq.s32.totalorder %s227, 0
      %s230 = sadd.s32 %s229, 1
      %s231 = scalar_select %p228, %s229, %s230
      %p234 = pneg %p228
      %p235 = scmp.eq.s32.totalorder %s20, 1
      %p236 = por %p234, %p235
      %p237 = scmp.ne.s32.totalorder %s229, %s232
      %p238 = scmp.eq.s32.totalorder %s20, 0
      %p239 = por %p237, %p238
      %p240 = scmp.ne.s32.totalorder %s229, %s232
      %p241 = scmp.eq.s32.totalorder %s25, 1
      %p242 = por %p240, %p241
      %p243 = scmp.ne.s32.totalorder %s232, %s233
      %p244 = scmp.eq.s32.totalorder %s25, 0
      %p245 = por %p243, %p244
      %p246 = scmp.ne.s32.totalorder %s232, %s233
      %p247 = scmp.eq.s32.totalorder %s26, 1
      %p248 = por %p246, %p247
      %p250 = scmp.ne.s32.totalorder %s233, %s249
      %p251 = scmp.eq.s32.totalorder %s26, 0
      %p252 = por %p250, %p251
      %p253 = scmp.le.s32.totalorder 1, %s20
      %p254 = scmp.lt.s32.totalorder %s20, 3
      %p255 = pnand %p253, %p254
      %p256 = pneg %p255
      // Predicated region
      $region9: #{ged_matrix_forward.1} parent=5 // pred_check
        _
      $region10: #{ged_matrix_forward.1} parent=5 // pred_check_branch
        %258 = sbr.rel (%p255) target = $region12
      $region11: #{ged_matrix_forward.1} parent=5 // pred_region
        %s259 = ssub.s32 %s20, 1
        // Predicated region
        $region13: #{ged_matrix_forward.1} parent=11 // pred_check
          %p260 = pneg %p93
        $region14: #{ged_matrix_forward.1} parent=11 // pred_check_branch
          %262 = sbr.rel (%p260) target = $region16
        $region15: #{ged_matrix_forward.1} parent=11 // pred_region
          _
        $region16: #{ged_matrix_forward.1} parent=11 // pred_fallthru
          _
        // Predicated region
        $region17: #{ged_matrix_forward.1} parent=11 // pred_check
          %p263 = pneg %p114
        $region18: #{ged_matrix_forward.1} parent=11 // pred_check_branch
          %265 = sbr.rel (%p263) target = $region20
        $region19: #{ged_matrix_forward.1} parent=11 // pred_region
          _
        $region20: #{ged_matrix_forward.1} parent=11 // pred_fallthru
          _
        // Predicated region
        $region21: #{ged_matrix_forward.1} parent=11 // pred_check
          %p266 = pneg %p135
        $region22: #{ged_matrix_forward.1} parent=11 // pred_check_branch
          %268 = sbr.rel (%p266) target = $region24
        $region23: #{ged_matrix_forward.1} parent=11 // pred_region
          _
        $region24: #{ged_matrix_forward.1} parent=11 // pred_fallthru
          _
        // Predicated region
        $region25: #{ged_matrix_forward.1} parent=11 // pred_check
          %p269 = pneg %p156
        $region26: #{ged_matrix_forward.1} parent=11 // pred_check_branch
          %271 = sbr.rel (%p269) target = $region28
        $region27: #{ged_matrix_forward.1} parent=11 // pred_region
          _
        $region28: #{ged_matrix_forward.1} parent=11 // pred_fallthru
          _
        // Predicated region
        $region29: #{ged_matrix_forward.1} parent=11 // pred_check
          %p272 = pneg %p177
        $region30: #{ged_matrix_forward.1} parent=11 // pred_check_branch
          %274 = sbr.rel (%p272) target = $region32
        $region31: #{ged_matrix_forward.1} parent=11 // pred_region
          _
        $region32: #{ged_matrix_forward.1} parent=11 // pred_fallthru
          _
        // Predicated region
        $region33: #{ged_matrix_forward.1} parent=11 // pred_check
          %p275 = pneg %p198
        $region34: #{ged_matrix_forward.1} parent=11 // pred_check_branch
          %277 = sbr.rel (%p275) target = $region36
        $region35: #{ged_matrix_forward.1} parent=11 // pred_region
          _
        $region36: #{ged_matrix_forward.1} parent=11 // pred_fallthru
          _
        // Predicated region
        $region37: #{ged_matrix_forward.1} parent=11 // pred_check
          %p278 = pneg %p219
        $region38: #{ged_matrix_forward.1} parent=11 // pred_check_branch
          %280 = sbr.rel (%p278) target = $region40
        $region39: #{ged_matrix_forward.1} parent=11 // pred_region
          _
        $region40: #{ged_matrix_forward.1} parent=11 // pred_fallthru
          _
      $region12: #{ged_matrix_forward.1} parent=5 // pred_fallthru
        _
      %p281 = scmp.lt.s32.totalorder %s20, 2
      // Predicated region
      $region41: #{ged_matrix_forward.1} parent=5 // pred_check
        %p282 = pneg %p281
      $region42: #{ged_matrix_forward.1} parent=5 // pred_check_branch
        %284 = sbr.rel (%p282) target = $region44
      $region43: #{ged_matrix_forward.1} parent=5 // pred_region
        // Predicated region
        $region45: #{ged_matrix_forward.1} parent=43 // pred_check
          %p285 = pneg %p40
        $region46: #{ged_matrix_forward.1} parent=43 // pred_check_branch
          %287 = sbr.rel (%p285) target = $region48
        $region47: #{ged_matrix_forward.1} parent=43 // pred_region
          %s288 = smul.u32 16, %s20
          %p289 = scmp.lt.s32.totalorder %s288, 31
          %s290 = scalar_select %p289, %s288, 31
          %s291 = smul.addr %s290, 8
          %s292 = scalar_lea.vmem %s0, %s291
          %s293 = smul.u32 16, %s20
        $region48: #{ged_matrix_forward.1} parent=43 // pred_fallthru
          _
        // Predicated region
        $region49: #{ged_matrix_forward.1} parent=43 // pred_check
          %p294 = pneg %p66
        $region50: #{ged_matrix_forward.1} parent=43 // pred_check_branch
          %296 = sbr.rel (%p294) target = $region52
        $region51: #{ged_matrix_forward.1} parent=43 // pred_region
          %s297 = smul.u32 16, %s20
          %p298 = scmp.lt.s32.totalorder %s297, 31
          %s299 = scalar_select %p298, %s297, 31
          %s300 = smul.addr %s299, 8
          %s301 = scalar_lea.vmem %s1, %s300
          %s302 = smul.u32 16, %s20
        $region52: #{ged_matrix_forward.1} parent=43 // pred_fallthru
          _
      $region44: #{ged_matrix_forward.1} parent=5 // pred_fallthru
        _
      %p303 = scmp.le.s32.totalorder 1, %s20
      %p304 = scmp.lt.s32.totalorder %s20, 3
      %p305 = pnand %p303, %p304
      %p306 = pneg %p305
      // Predicated region
      $region53: #{ged_matrix_forward.1} parent=5 // pred_check
        _
      $region54: #{ged_matrix_forward.1} parent=5 // pred_check_branch
        %308 = sbr.rel (%p305) target = $region56
      $region55: #{ged_matrix_forward.1} parent=5 // pred_region
        %s309 = ssub.s32 %s20, 1
        %s310 = smul.u32 16, %s25
        %p311 = scmp.lt.s32.totalorder %s310, 31
        %s312 = scalar_select %p311, %s310, 31
        %s313 = smul.addr %s312, 8
        %s314 = scalar_lea.vmem %s0, %s313
        %p315 = pneg %p46
        %p316 = pneg %p43
        %s317 = smul.u32 16, %s25
        %p318 = scmp.lt.s32.totalorder %s317, 31
        %s319 = scalar_select %p318, %s317, 31
        %s320 = smul.addr %s319, 8
        %s321 = scalar_lea.vmem %s1, %s320
        %p322 = pneg %p72
        %p323 = pneg %p69
        %p324 = pneg %p93
        %p325 = pneg %p90
        %p326 = pneg %p114
        %p327 = pneg %p111
        %p328 = pneg %p135
        %p329 = pneg %p132
        %p330 = pneg %p156
        %p331 = pneg %p153
        %p332 = pneg %p177
        %p333 = pneg %p174
        %p334 = pneg %p198
        %p335 = pneg %p195
        %p336 = pneg %p219
        %p337 = pneg %p216
        %p338 = pneg %p245
        %p339 = pneg %p242
        %s340 = sand.u32 %s232, 1
        %s341 = scalar_lea.sflag [#allocation4], %s340
        %s342 = sand.u32 %s232, 1
        %s343 = scalar_lea.vmem [#allocation3], %s342
        %s344 = smul.u32 16, %s25
        %p345 = scmp.lt.s32.totalorder %s344, 31
        %s346 = scalar_select %p345, %s344, 31
        %s347 = smul.addr %s346, 8
        %s348 = scalar_lea.vmem %s0, %s347
        %s349 = smul.u32 16, %s25
        %s350 = smul.u32 16, %s25
        %p351 = scmp.lt.s32.totalorder %s350, 31
        %s352 = scalar_select %p351, %s350, 31
        %s353 = smul.addr %s352, 8
        %s354 = scalar_lea.vmem %s1, %s353
        %s355 = smul.u32 16, %s25
        %v356 = vld [vmem:[%s348] sm:$0xff]
        %v357 = vld [vmem:[%s348 + $0x8] sm:$0xff]
        %v358 = vld [vmem:[%s348 + $0x10] sm:$0xff]
        %v359 = vld [vmem:[%s348 + $0x18] sm:$0xff]
        %v360 = vld [vmem:[%s348 + $0x20] sm:$0xff]
        %v361 = vld [vmem:[%s348 + $0x28] sm:$0xff]
        %v362 = vld [vmem:[%s348 + $0x30] sm:$0xff]
        %v363 = vld [vmem:[%s348 + $0x38] sm:$0xff]
        %v364 = vld [vmem:[%s348 + $0x40] sm:$0xff]
        %v365 = vld [vmem:[%s348 + $0x48] sm:$0xff]
        %v366 = vld [vmem:[%s348 + $0x50] sm:$0xff]
        %v367 = vld [vmem:[%s348 + $0x58] sm:$0xff]
        %v368 = vld [vmem:[%s348 + $0x60] sm:$0xff]
        %v369 = vld [vmem:[%s348 + $0x68] sm:$0xff]
        %v370 = vld [vmem:[%s348 + $0x70] sm:$0xff]
        %v371 = vld [vmem:[%s348 + $0x78] sm:$0xff]
        %v372 = vld [vmem:[%s354] sm:$0xff]
        %v373 = vld [vmem:[%s354 + $0x8] sm:$0xff]
        %v374 = vld [vmem:[%s354 + $0x10] sm:$0xff]
        %v375 = vld [vmem:[%s354 + $0x18] sm:$0xff]
        %v376 = vld [vmem:[%s354 + $0x20] sm:$0xff]
        %v377 = vld [vmem:[%s354 + $0x28] sm:$0xff]
        %v378 = vld [vmem:[%s354 + $0x30] sm:$0xff]
        %v379 = vld [vmem:[%s354 + $0x38] sm:$0xff]
        %v380 = vld [vmem:[%s354 + $0x40] sm:$0xff]
        %v381 = vld [vmem:[%s354 + $0x48] sm:$0xff]
        %v382 = vld [vmem:[%s354 + $0x50] sm:$0xff]
        %v383 = vld [vmem:[%s354 + $0x58] sm:$0xff]
        %v384 = vld [vmem:[%s354 + $0x60] sm:$0xff]
        %v385 = vld [vmem:[%s354 + $0x68] sm:$0xff]
        %v386 = vld [vmem:[%s354 + $0x70] sm:$0xff]
        %v387 = vld [vmem:[%s354 + $0x78] sm:$0xff]
        %v388 = vld [vmem:[%s2] sm:$0xff]
        %v389 = vld [vmem:[%s2 + $0x8] sm:$0xff]
        %v390 = vld [vmem:[%s2 + $0x10] sm:$0xff]
        %v391 = vld [vmem:[%s2 + $0x18] sm:$0xff]
        %v392 = vld [vmem:[%s2 + $0x20] sm:$0xff]
        %v393 = vld [vmem:[%s2 + $0x28] sm:$0xff]
        %v394 = vld [vmem:[%s2 + $0x30] sm:$0xff]
        %v395 = vld [vmem:[%s2 + $0x38] sm:$0xff]
        %vm396 = vcmask 261120
        %v398 = vsel %vm396, %v356, 0
        %v401 = vsel %vm396, %v357, 0
        %v404 = vsel %vm396, %v358, 0
        %v407 = vsel %vm396, %v359, 0
        %v410 = vsel %vm396, %v360, 0
        %v413 = vsel %vm396, %v361, 0
        %v416 = vsel %vm396, %v362, 0
        %v419 = vsel %vm396, %v363, 0
        %v422 = vsel %vm396, %v364, 0
        %v425 = vsel %vm396, %v365, 0
        %v428 = vsel %vm396, %v366, 0
        %v431 = vsel %vm396, %v367, 0
        %v434 = vsel %vm396, %v368, 0
        %v437 = vsel %vm396, %v369, 0
        %v440 = vsel %vm396, %v370, 0
        %v443 = vsel %vm396, %v371, 0
        %445 = vmatpush.msra.mxu0 0.0
        %446 = vmatpush.msra.mxu0 0.0
        %447 = vmatpush.msra.mxu0 0.0
        %448 = vmatpush.msra.mxu0 0.0
        %449 = vmatpush.msra.mxu0 0.0
        %450 = vmatpush.msra.mxu0 0.0
        %451 = vmatpush.msra.mxu0 0.0
        %452 = vmatpush.msra.mxu0 0.0
        %453 = vmatpush.msra.mxu0 0.0
        %454 = vmatpush.msra.mxu0 0.0
        %455 = vmatpush.msra.mxu0 0.0
        %456 = vmatpush.msra.mxu0 0.0
        %457 = vmatpush.msra.mxu0 %v394
        %458 = vmatpush.msra.mxu0 %v392
        %459 = vmatpush.msra.mxu0 %v390
        %460 = vmatpush.msra.mxu0 %v388
        %461 = vmatmul.f32.gmra.mxu0 %v398
        %v462 = vpop.f32.mrf.mxu0
        %v463 = vadd.f32 0.0, %v462
        %464 = vmatmul.f32.gmra.mxu0 %v401
        %v465 = vpop.f32.mrf.mxu0
        %v466 = vadd.f32 0.0, %v465
        %467 = vmatmul.f32.gmra.mxu0 %v404
        %v468 = vpop.f32.mrf.mxu0
        %v469 = vadd.f32 0.0, %v468
        %470 = vmatmul.f32.gmra.mxu0 %v407
        %v471 = vpop.f32.mrf.mxu0
        %v472 = vadd.f32 0.0, %v471
        %473 = vmatmul.f32.gmra.mxu0 %v410
        %v474 = vpop.f32.mrf.mxu0
        %v475 = vadd.f32 0.0, %v474
        %476 = vmatmul.f32.gmra.mxu0 %v413
        %v477 = vpop.f32.mrf.mxu0
        %v478 = vadd.f32 0.0, %v477
        %479 = vmatmul.f32.gmra.mxu0 %v416
        %v480 = vpop.f32.mrf.mxu0
        %v481 = vadd.f32 0.0, %v480
        %482 = vmatmul.f32.gmra.mxu0 %v419
        %v483 = vpop.f32.mrf.mxu0
        %v484 = vadd.f32 0.0, %v483
        %485 = vmatmul.f32.gmra.mxu0 %v422
        %v486 = vpop.f32.mrf.mxu0
        %v487 = vadd.f32 0.0, %v486
        %488 = vmatmul.f32.gmra.mxu0 %v425
        %v489 = vpop.f32.mrf.mxu0
        %v490 = vadd.f32 0.0, %v489
        %491 = vmatmul.f32.gmra.mxu0 %v428
        %v492 = vpop.f32.mrf.mxu0
        %v493 = vadd.f32 0.0, %v492
        %494 = vmatmul.f32.gmra.mxu0 %v431
        %v495 = vpop.f32.mrf.mxu0
        %v496 = vadd.f32 0.0, %v495
        %497 = vmatmul.f32.gmra.mxu0 %v434
        %v498 = vpop.f32.mrf.mxu0
        %v499 = vadd.f32 0.0, %v498
        %500 = vmatmul.f32.gmra.mxu0 %v437
        %v501 = vpop.f32.mrf.mxu0
        %v502 = vadd.f32 0.0, %v501
        %503 = vmatmul.f32.gmra.mxu0 %v440
        %v504 = vpop.f32.mrf.mxu0
        %v505 = vadd.f32 0.0, %v504
        %506 = vmatmul.f32.gmra.mxu0 %v443
        %v507 = vpop.f32.mrf.mxu0
        %v508 = vadd.f32 0.0, %v507
        %509 = vdwg.mxu0
        %510 = vmatpush.msra.mxu0 0.0
        %511 = vmatpush.msra.mxu0 0.0
        %512 = vmatpush.msra.mxu0 0.0
        %513 = vmatpush.msra.mxu0 0.0
        %514 = vmatpush.msra.mxu0 0.0
        %515 = vmatpush.msra.mxu0 0.0
        %516 = vmatpush.msra.mxu0 0.0
        %517 = vmatpush.msra.mxu0 0.0
        %518 = vmatpush.msra.mxu0 0.0
        %519 = vmatpush.msra.mxu0 0.0
        %520 = vmatpush.msra.mxu0 0.0
        %521 = vmatpush.msra.mxu0 0.0
        %522 = vmatpush.msra.mxu0 %v395
        %523 = vmatpush.msra.mxu0 %v393
        %524 = vmatpush.msra.mxu0 %v391
        %525 = vmatpush.msra.mxu0 %v389
        %526 = vmatmul.f32.gmra.mxu0 %v398
        %v527 = vpop.f32.mrf.mxu0
        %v528 = vadd.f32 0.0, %v527
        %529 = vmatmul.f32.gmra.mxu0 %v401
        %v530 = vpop.f32.mrf.mxu0
        %v531 = vadd.f32 0.0, %v530
        %532 = vmatmul.f32.gmra.mxu0 %v404
        %v533 = vpop.f32.mrf.mxu0
        %v534 = vadd.f32 0.0, %v533
        %535 = vmatmul.f32.gmra.mxu0 %v407
        %v536 = vpop.f32.mrf.mxu0
        %v537 = vadd.f32 0.0, %v536
        %538 = vmatmul.f32.gmra.mxu0 %v410
        %v539 = vpop.f32.mrf.mxu0
        %v540 = vadd.f32 0.0, %v539
        %541 = vmatmul.f32.gmra.mxu0 %v413
        %v542 = vpop.f32.mrf.mxu0
        %v543 = vadd.f32 0.0, %v542
        %544 = vmatmul.f32.gmra.mxu0 %v416
        %v545 = vpop.f32.mrf.mxu0
        %v546 = vadd.f32 0.0, %v545
        %547 = vmatmul.f32.gmra.mxu0 %v419
        %v548 = vpop.f32.mrf.mxu0
        %v549 = vadd.f32 0.0, %v548
        %550 = vmatmul.f32.gmra.mxu0 %v422
        %v551 = vpop.f32.mrf.mxu0
        %v552 = vadd.f32 0.0, %v551
        %553 = vmatmul.f32.gmra.mxu0 %v425
        %v554 = vpop.f32.mrf.mxu0
        %v555 = vadd.f32 0.0, %v554
        %556 = vmatmul.f32.gmra.mxu0 %v428
        %v557 = vpop.f32.mrf.mxu0
        %v558 = vadd.f32 0.0, %v557
        %559 = vmatmul.f32.gmra.mxu0 %v431
        %v560 = vpop.f32.mrf.mxu0
        %v561 = vadd.f32 0.0, %v560
        %562 = vmatmul.f32.gmra.mxu0 %v434
        %v563 = vpop.f32.mrf.mxu0
        %v564 = vadd.f32 0.0, %v563
        %565 = vmatmul.f32.gmra.mxu0 %v437
        %v566 = vpop.f32.mrf.mxu0
        %v567 = vadd.f32 0.0, %v566
        %568 = vmatmul.f32.gmra.mxu0 %v440
        %v569 = vpop.f32.mrf.mxu0
        %v570 = vadd.f32 0.0, %v569
        %571 = vmatmul.f32.gmra.mxu0 %v443
        %v572 = vpop.f32.mrf.mxu0
        %v573 = vadd.f32 0.0, %v572
        %574 = vdwg.mxu0
        %591 = vrot.lane.b32.xlu0 %v372, 32
        %v592 = vpop.permute.xlu0 %591
        %593 = vrot.lane.b32.xlu0 %v373, 32
        %v594 = vpop.permute.xlu0 %593
        %595 = vrot.lane.b32.xlu0 %v374, 32
        %v596 = vpop.permute.xlu0 %595
        %597 = vrot.lane.b32.xlu0 %v375, 32
        %v598 = vpop.permute.xlu0 %597
        %599 = vrot.lane.b32.xlu0 %v376, 32
        %v600 = vpop.permute.xlu0 %599
        %601 = vrot.lane.b32.xlu0 %v377, 32
        %v602 = vpop.permute.xlu0 %601
        %603 = vrot.lane.b32.xlu0 %v378, 32
        %v604 = vpop.permute.xlu0 %603
        %605 = vrot.lane.b32.xlu0 %v379, 32
        %v606 = vpop.permute.xlu0 %605
        %607 = vrot.lane.b32.xlu0 %v380, 32
        %v608 = vpop.permute.xlu0 %607
        %609 = vrot.lane.b32.xlu0 %v381, 32
        %v610 = vpop.permute.xlu0 %609
        %611 = vrot.lane.b32.xlu0 %v382, 32
        %v612 = vpop.permute.xlu0 %611
        %613 = vrot.lane.b32.xlu0 %v383, 32
        %v614 = vpop.permute.xlu0 %613
        %615 = vrot.lane.b32.xlu0 %v384, 32
        %v616 = vpop.permute.xlu0 %615
        %617 = vrot.lane.b32.xlu0 %v385, 32
        %v618 = vpop.permute.xlu0 %617
        %619 = vrot.lane.b32.xlu0 %v386, 32
        %v620 = vpop.permute.xlu0 %619
        %621 = vrot.lane.b32.xlu0 %v387, 32
        %v622 = vpop.permute.xlu0 %621
        %639 = vrot.lane.b32.xlu0 %v372, 64
        %v640 = vpop.permute.xlu0 %639
        %641 = vrot.lane.b32.xlu0 %v373, 64
        %v642 = vpop.permute.xlu0 %641
        %643 = vrot.lane.b32.xlu0 %v374, 64
        %v644 = vpop.permute.xlu0 %643
        %645 = vrot.lane.b32.xlu0 %v375, 64
        %v646 = vpop.permute.xlu0 %645
        %647 = vrot.lane.b32.xlu0 %v376, 64
        %v648 = vpop.permute.xlu0 %647
        %649 = vrot.lane.b32.xlu0 %v377, 64
        %v650 = vpop.permute.xlu0 %649
        %651 = vrot.lane.b32.xlu0 %v378, 64
        %v652 = vpop.permute.xlu0 %651
        %653 = vrot.lane.b32.xlu0 %v379, 64
        %v654 = vpop.permute.xlu0 %653
        %655 = vrot.lane.b32.xlu0 %v380, 64
        %v656 = vpop.permute.xlu0 %655
        %657 = vrot.lane.b32.xlu0 %v381, 64
        %v658 = vpop.permute.xlu0 %657
        %659 = vrot.lane.b32.xlu0 %v382, 64
        %v660 = vpop.permute.xlu0 %659
        %661 = vrot.lane.b32.xlu0 %v383, 64
        %v662 = vpop.permute.xlu0 %661
        %663 = vrot.lane.b32.xlu0 %v384, 64
        %v664 = vpop.permute.xlu0 %663
        %665 = vrot.lane.b32.xlu0 %v385, 64
        %v666 = vpop.permute.xlu0 %665
        %667 = vrot.lane.b32.xlu0 %v386, 64
        %v668 = vpop.permute.xlu0 %667
        %669 = vrot.lane.b32.xlu0 %v387, 64
        %v670 = vpop.permute.xlu0 %669
        %687 = vrot.lane.b32.xlu0 %v372, 96
        %v688 = vpop.permute.xlu0 %687
        %689 = vrot.lane.b32.xlu0 %v373, 96
        %v690 = vpop.permute.xlu0 %689
        %691 = vrot.lane.b32.xlu0 %v374, 96
        %v692 = vpop.permute.xlu0 %691
        %693 = vrot.lane.b32.xlu0 %v375, 96
        %v694 = vpop.permute.xlu0 %693
        %695 = vrot.lane.b32.xlu0 %v376, 96
        %v696 = vpop.permute.xlu0 %695
        %697 = vrot.lane.b32.xlu0 %v377, 96
        %v698 = vpop.permute.xlu0 %697
        %699 = vrot.lane.b32.xlu0 %v378, 96
        %v700 = vpop.permute.xlu0 %699
        %701 = vrot.lane.b32.xlu0 %v379, 96
        %v702 = vpop.permute.xlu0 %701
        %703 = vrot.lane.b32.xlu0 %v380, 96
        %v704 = vpop.permute.xlu0 %703
        %705 = vrot.lane.b32.xlu0 %v381, 96
        %v706 = vpop.permute.xlu0 %705
        %707 = vrot.lane.b32.xlu0 %v382, 96
        %v708 = vpop.permute.xlu0 %707
        %709 = vrot.lane.b32.xlu0 %v383, 96
        %v710 = vpop.permute.xlu0 %709
        %711 = vrot.lane.b32.xlu0 %v384, 96
        %v712 = vpop.permute.xlu0 %711
        %713 = vrot.lane.b32.xlu0 %v385, 96
        %v714 = vpop.permute.xlu0 %713
        %715 = vrot.lane.b32.xlu0 %v386, 96
        %v716 = vpop.permute.xlu0 %715
        %717 = vrot.lane.b32.xlu0 %v387, 96
        %v718 = vpop.permute.xlu0 %717
        %v735 = vsel %vm396, %v372, %v592
        %v736 = vsel %vm396, %v373, %v594
        %v737 = vsel %vm396, %v374, %v596
        %v738 = vsel %vm396, %v375, %v598
        %v739 = vsel %vm396, %v376, %v600
        %v740 = vsel %vm396, %v377, %v602
        %v741 = vsel %vm396, %v378, %v604
        %v742 = vsel %vm396, %v379, %v606
        %v743 = vsel %vm396, %v380, %v608
        %v744 = vsel %vm396, %v381, %v610
        %v745 = vsel %vm396, %v382, %v612
        %v746 = vsel %vm396, %v383, %v614
        %v747 = vsel %vm396, %v384, %v616
        %v748 = vsel %vm396, %v385, %v618
        %v749 = vsel %vm396, %v386, %v620
        %v750 = vsel %vm396, %v387, %v622
        %vm751 = vcmask 523264
        %v752 = vsel %vm751, %v735, %v640
        %v753 = vsel %vm751, %v736, %v642
        %v754 = vsel %vm751, %v737, %v644
        %v755 = vsel %vm751, %v738, %v646
        %v756 = vsel %vm751, %v739, %v648
        %v757 = vsel %vm751, %v740, %v650
        %v758 = vsel %vm751, %v741, %v652
        %v759 = vsel %vm751, %v742, %v654
        %v760 = vsel %vm751, %v743, %v656
        %v761 = vsel %vm751, %v744, %v658
        %v762 = vsel %vm751, %v745, %v660
        %v763 = vsel %vm751, %v746, %v662
        %v764 = vsel %vm751, %v747, %v664
        %v765 = vsel %vm751, %v748, %v666
        %v766 = vsel %vm751, %v749, %v668
        %v767 = vsel %vm751, %v750, %v670
        %vm768 = vcmask 785408
        %v769 = vsel %vm768, %v752, %v688
        %v770 = vsel %vm768, %v753, %v690
        %v771 = vsel %vm768, %v754, %v692
        %v772 = vsel %vm768, %v755, %v694
        %v773 = vsel %vm768, %v756, %v696
        %v774 = vsel %vm768, %v757, %v698
        %v775 = vsel %vm768, %v758, %v700
        %v776 = vsel %vm768, %v759, %v702
        %v777 = vsel %vm768, %v760, %v704
        %v778 = vsel %vm768, %v761, %v706
        %v779 = vsel %vm768, %v762, %v708
        %v780 = vsel %vm768, %v763, %v710
        %v781 = vsel %vm768, %v764, %v712
        %v782 = vsel %vm768, %v765, %v714
        %v783 = vsel %vm768, %v766, %v716
        %v784 = vsel %vm768, %v767, %v718
        %v785 = vmul.f32 %v463, %v769
        %v786 = vmul.f32 %v528, %v769
        %v787 = vmul.f32 %v466, %v770
        %v788 = vmul.f32 %v531, %v770
        %v789 = vmul.f32 %v469, %v771
        %v790 = vmul.f32 %v534, %v771
        %v791 = vmul.f32 %v472, %v772
        %v792 = vmul.f32 %v537, %v772
        %v793 = vmul.f32 %v475, %v773
        %v794 = vmul.f32 %v540, %v773
        %v795 = vmul.f32 %v478, %v774
        %v796 = vmul.f32 %v543, %v774
        %v797 = vmul.f32 %v481, %v775
        %v798 = vmul.f32 %v546, %v775
        %v799 = vmul.f32 %v484, %v776
        %v800 = vmul.f32 %v549, %v776
        %v801 = vmul.f32 %v487, %v777
        %v802 = vmul.f32 %v552, %v777
        %v803 = vmul.f32 %v490, %v778
        %v804 = vmul.f32 %v555, %v778
        %v805 = vmul.f32 %v493, %v779
        %v806 = vmul.f32 %v558, %v779
        %v807 = vmul.f32 %v496, %v780
        %v808 = vmul.f32 %v561, %v780
        %v809 = vmul.f32 %v499, %v781
        %v810 = vmul.f32 %v564, %v781
        %v811 = vmul.f32 %v502, %v782
        %v812 = vmul.f32 %v567, %v782
        %v813 = vmul.f32 %v505, %v783
        %v814 = vmul.f32 %v570, %v783
        %v815 = vmul.f32 %v508, %v784
        %v816 = vmul.f32 %v573, %v784
        %v817 = vld [vmem:[%s3] sm:$0xff]
        %v818 = vld [vmem:[%s3 + $0x8] sm:$0xff]
        %v819 = vld [vmem:[%s3 + $0x10] sm:$0xff]
        %v820 = vld [vmem:[%s3 + $0x18] sm:$0xff]
        %v821 = vld [vmem:[%s3 + $0x20] sm:$0xff]
        %v822 = vld [vmem:[%s3 + $0x28] sm:$0xff]
        %v823 = vld [vmem:[%s3 + $0x30] sm:$0xff]
        %v824 = vld [vmem:[%s3 + $0x38] sm:$0xff]
        %v825 = vld [vmem:[%s3 + $0x40] sm:$0xff]
        %v826 = vld [vmem:[%s3 + $0x48] sm:$0xff]
        %v827 = vld [vmem:[%s3 + $0x50] sm:$0xff]
        %v828 = vld [vmem:[%s3 + $0x58] sm:$0xff]
        %v829 = vld [vmem:[%s3 + $0x60] sm:$0xff]
        %v830 = vld [vmem:[%s3 + $0x68] sm:$0xff]
        %v831 = vld [vmem:[%s3 + $0x70] sm:$0xff]
        %v832 = vld [vmem:[%s3 + $0x78] sm:$0xff]
        %v833 = vld [vmem:[%s3 + $0x80] sm:$0xff]
        %v834 = vld [vmem:[%s3 + $0x88] sm:$0xff]
        %v835 = vld [vmem:[%s3 + $0x90] sm:$0xff]
        %v836 = vld [vmem:[%s3 + $0x98] sm:$0xff]
        %v837 = vld [vmem:[%s3 + $0xa0] sm:$0xff]
        %v838 = vld [vmem:[%s3 + $0xa8] sm:$0xff]
        %v839 = vld [vmem:[%s3 + $0xb0] sm:$0xff]
        %v840 = vld [vmem:[%s3 + $0xb8] sm:$0xff]
        %v841 = vld [vmem:[%s3 + $0xc0] sm:$0xff]
        %v842 = vld [vmem:[%s3 + $0xc8] sm:$0xff]
        %v843 = vld [vmem:[%s3 + $0xd0] sm:$0xff]
        %v844 = vld [vmem:[%s3 + $0xd8] sm:$0xff]
        %v845 = vld [vmem:[%s3 + $0xe0] sm:$0xff]
        %v846 = vld [vmem:[%s3 + $0xe8] sm:$0xff]
        %v847 = vld [vmem:[%s3 + $0xf0] sm:$0xff]
        %v848 = vld [vmem:[%s3 + $0xf8] sm:$0xff]
        %v849 = vld [vmem:[%s4] sm:$0x1]
        %v851 = vperm.slane %v849, 0
        %853 = vmatpush.msra.mxu0 %v832
        %854 = vmatpush.msra.mxu0 %v831
        %855 = vmatpush.msra.mxu0 %v830
        %856 = vmatpush.msra.mxu0 %v829
        %857 = vmatpush.msra.mxu0 %v828
        %858 = vmatpush.msra.mxu0 %v827
        %859 = vmatpush.msra.mxu0 %v826
        %860 = vmatpush.msra.mxu0 %v825
        %861 = vmatpush.msra.mxu0 %v824
        %862 = vmatpush.msra.mxu0 %v823
        %863 = vmatpush.msra.mxu0 %v822
        %864 = vmatpush.msra.mxu0 %v821
        %865 = vmatpush.msra.mxu0 %v820
        %866 = vmatpush.msra.mxu0 %v819
        %867 = vmatpush.msra.mxu0 %v818
        %868 = vmatpush.msra.mxu0 %v817
        %869 = vmatmul.f32.gmra.mxu0 %v785
        %v870 = vpop.f32.mrf.mxu0
        %v871 = vadd.f32 %v851, %v870
        %872 = vmatmul.f32.gmra.mxu0 %v787
        %v873 = vpop.f32.mrf.mxu0
        %v874 = vadd.f32 %v851, %v873
        %875 = vmatmul.f32.gmra.mxu0 %v789
        %v876 = vpop.f32.mrf.mxu0
        %v877 = vadd.f32 %v851, %v876
        %878 = vmatmul.f32.gmra.mxu0 %v791
        %v879 = vpop.f32.mrf.mxu0
        %v880 = vadd.f32 %v851, %v879
        %881 = vmatmul.f32.gmra.mxu0 %v793
        %v882 = vpop.f32.mrf.mxu0
        %v883 = vadd.f32 %v851, %v882
        %884 = vmatmul.f32.gmra.mxu0 %v795
        %v885 = vpop.f32.mrf.mxu0
        %v886 = vadd.f32 %v851, %v885
        %887 = vmatmul.f32.gmra.mxu0 %v797
        %v888 = vpop.f32.mrf.mxu0
        %v889 = vadd.f32 %v851, %v888
        %890 = vmatmul.f32.gmra.mxu0 %v799
        %v891 = vpop.f32.mrf.mxu0
        %v892 = vadd.f32 %v851, %v891
        %893 = vmatmul.f32.gmra.mxu0 %v801
        %v894 = vpop.f32.mrf.mxu0
        %v895 = vadd.f32 %v851, %v894
        %896 = vmatmul.f32.gmra.mxu0 %v803
        %v897 = vpop.f32.mrf.mxu0
        %v898 = vadd.f32 %v851, %v897
        %899 = vmatmul.f32.gmra.mxu0 %v805
        %v900 = vpop.f32.mrf.mxu0
        %v901 = vadd.f32 %v851, %v900
        %902 = vmatmul.f32.gmra.mxu0 %v807
        %v903 = vpop.f32.mrf.mxu0
        %v904 = vadd.f32 %v851, %v903
        %905 = vmatmul.f32.gmra.mxu0 %v809
        %v906 = vpop.f32.mrf.mxu0
        %v907 = vadd.f32 %v851, %v906
        %908 = vmatmul.f32.gmra.mxu0 %v811
        %v909 = vpop.f32.mrf.mxu0
        %v910 = vadd.f32 %v851, %v909
        %911 = vmatmul.f32.gmra.mxu0 %v813
        %v912 = vpop.f32.mrf.mxu0
        %v913 = vadd.f32 %v851, %v912
        %914 = vmatmul.f32.gmra.mxu0 %v815
        %v915 = vpop.f32.mrf.mxu0
        %v916 = vadd.f32 %v851, %v915
        %917 = vdwg.mxu0
        %918 = vmatpush.msra.mxu0 %v848
        %919 = vmatpush.msra.mxu0 %v847
        %920 = vmatpush.msra.mxu0 %v846
        %921 = vmatpush.msra.mxu0 %v845
        %922 = vmatpush.msra.mxu0 %v844
        %923 = vmatpush.msra.mxu0 %v843
        %924 = vmatpush.msra.mxu0 %v842
        %925 = vmatpush.msra.mxu0 %v841
        %926 = vmatpush.msra.mxu0 %v840
        %927 = vmatpush.msra.mxu0 %v839
        %928 = vmatpush.msra.mxu0 %v838
        %929 = vmatpush.msra.mxu0 %v837
        %930 = vmatpush.msra.mxu0 %v836
        %931 = vmatpush.msra.mxu0 %v835
        %932 = vmatpush.msra.mxu0 %v834
        %933 = vmatpush.msra.mxu0 %v833
        %934 = vmatmul.f32.gmra.mxu0 %v786
        %v935 = vpop.f32.mrf.mxu0
        %v936 = vadd.f32 %v871, %v935
        %937 = vmatmul.f32.gmra.mxu0 %v788
        %v938 = vpop.f32.mrf.mxu0
        %v939 = vadd.f32 %v874, %v938
        %940 = vmatmul.f32.gmra.mxu0 %v790
        %v941 = vpop.f32.mrf.mxu0
        %v942 = vadd.f32 %v877, %v941
        %943 = vmatmul.f32.gmra.mxu0 %v792
        %v944 = vpop.f32.mrf.mxu0
        %v945 = vadd.f32 %v880, %v944
        %946 = vmatmul.f32.gmra.mxu0 %v794
        %v947 = vpop.f32.mrf.mxu0
        %v948 = vadd.f32 %v883, %v947
        %949 = vmatmul.f32.gmra.mxu0 %v796
        %v950 = vpop.f32.mrf.mxu0
        %v951 = vadd.f32 %v886, %v950
        %952 = vmatmul.f32.gmra.mxu0 %v798
        %v953 = vpop.f32.mrf.mxu0
        %v954 = vadd.f32 %v889, %v953
        %955 = vmatmul.f32.gmra.mxu0 %v800
        %v956 = vpop.f32.mrf.mxu0
        %v957 = vadd.f32 %v892, %v956
        %958 = vmatmul.f32.gmra.mxu0 %v802
        %v959 = vpop.f32.mrf.mxu0
        %v960 = vadd.f32 %v895, %v959
        %961 = vmatmul.f32.gmra.mxu0 %v804
        %v962 = vpop.f32.mrf.mxu0
        %v963 = vadd.f32 %v898, %v962
        %964 = vmatmul.f32.gmra.mxu0 %v806
        %v965 = vpop.f32.mrf.mxu0
        %v966 = vadd.f32 %v901, %v965
        %967 = vmatmul.f32.gmra.mxu0 %v808
        %v968 = vpop.f32.mrf.mxu0
        %v969 = vadd.f32 %v904, %v968
        %970 = vmatmul.f32.gmra.mxu0 %v810
        %v971 = vpop.f32.mrf.mxu0
        %v972 = vadd.f32 %v907, %v971
        %973 = vmatmul.f32.gmra.mxu0 %v812
        %v974 = vpop.f32.mrf.mxu0
        %v975 = vadd.f32 %v910, %v974
        %976 = vmatmul.f32.gmra.mxu0 %v814
        %v977 = vpop.f32.mrf.mxu0
        %v978 = vadd.f32 %v913, %v977
        %979 = vmatmul.f32.gmra.mxu0 %v816
        %v980 = vpop.f32.mrf.mxu0
        %v981 = vadd.f32 %v916, %v980
        %982 = vdwg.mxu0
        %v983 = vmax.f32 %v936, 0.0
        %v984 = vmax.f32 %v939, 0.0
        %v985 = vmax.f32 %v942, 0.0
        %v986 = vmax.f32 %v945, 0.0
        %v987 = vmax.f32 %v948, 0.0
        %v988 = vmax.f32 %v951, 0.0
        %v989 = vmax.f32 %v954, 0.0
        %v990 = vmax.f32 %v957, 0.0
        %v991 = vmax.f32 %v960, 0.0
        %v992 = vmax.f32 %v963, 0.0
        %v993 = vmax.f32 %v966, 0.0
        %v994 = vmax.f32 %v969, 0.0
        %v995 = vmax.f32 %v972, 0.0
        %v996 = vmax.f32 %v975, 0.0
        %v997 = vmax.f32 %v978, 0.0
        %v998 = vmax.f32 %v981, 0.0
        %v999 = vld [vmem:[%s5] sm:$0xff]
        %v1000 = vld [vmem:[%s5 + $0x8] sm:$0xff]
        %v1001 = vld [vmem:[%s6] sm:$0x1]
        %v1003 = vperm.slane %v1001, 0
        %vm1005 = vcmask 130048
        %v1007 = vsel %vm1005, %v983, 0
        %v1010 = vsel %vm1005, %v984, 0
        %v1013 = vsel %vm1005, %v985, 0
        %v1016 = vsel %vm1005, %v986, 0
        %v1019 = vsel %vm1005, %v987, 0
        %v1022 = vsel %vm1005, %v988, 0
        %v1025 = vsel %vm1005, %v989, 0
        %v1028 = vsel %vm1005, %v990, 0
        %v1031 = vsel %vm1005, %v991, 0
        %v1034 = vsel %vm1005, %v992, 0
        %v1037 = vsel %vm1005, %v993, 0
        %v1040 = vsel %vm1005, %v994, 0
        %v1043 = vsel %vm1005, %v995, 0
        %v1046 = vsel %vm1005, %v996, 0
        %v1049 = vsel %vm1005, %v997, 0
        %v1052 = vsel %vm1005, %v998, 0
        %1054 = vmatpush.msra.mxu0 0.0
        %1055 = vmatpush.msra.mxu0 0.0
        %1056 = vmatpush.msra.mxu0 0.0
        %1057 = vmatpush.msra.mxu0 0.0
        %1058 = vmatpush.msra.mxu0 0.0
        %1059 = vmatpush.msra.mxu0 0.0
        %1060 = vmatpush.msra.mxu0 0.0
        %1061 = vmatpush.msra.mxu0 0.0
        %1062 = vmatpush.msra.mxu0 0.0
        %1063 = vmatpush.msra.mxu0 0.0
        %1064 = vmatpush.msra.mxu0 0.0
        %1065 = vmatpush.msra.mxu0 0.0
        %1066 = vmatpush.msra.mxu0 0.0
        %1067 = vmatpush.msra.mxu0 0.0
        %1068 = vmatpush.msra.mxu0 %v1000
        %1069 = vmatpush.msra.mxu0 %v999
        %1070 = vmatmul.f32.gmra.mxu0 %v1007
        %v1071 = vpop.f32.mrf.mxu0
        %v1072 = vadd.f32 %v1003, %v1071
        %1073 = vmatmul.f32.gmra.mxu0 %v1010
        %v1074 = vpop.f32.mrf.mxu0
        %v1075 = vadd.f32 %v1003, %v1074
        %1076 = vmatmul.f32.gmra.mxu0 %v1013
        %v1077 = vpop.f32.mrf.mxu0
        %v1078 = vadd.f32 %v1003, %v1077
        %1079 = vmatmul.f32.gmra.mxu0 %v1016
        %v1080 = vpop.f32.mrf.mxu0
        %v1081 = vadd.f32 %v1003, %v1080
        %1082 = vmatmul.f32.gmra.mxu0 %v1019
        %v1083 = vpop.f32.mrf.mxu0
        %v1084 = vadd.f32 %v1003, %v1083
        %1085 = vmatmul.f32.gmra.mxu0 %v1022
        %v1086 = vpop.f32.mrf.mxu0
        %v1087 = vadd.f32 %v1003, %v1086
        %1088 = vmatmul.f32.gmra.mxu0 %v1025
        %v1089 = vpop.f32.mrf.mxu0
        %v1090 = vadd.f32 %v1003, %v1089
        %1091 = vmatmul.f32.gmra.mxu0 %v1028
        %v1092 = vpop.f32.mrf.mxu0
        %v1093 = vadd.f32 %v1003, %v1092
        %1094 = vmatmul.f32.gmra.mxu0 %v1031
        %v1095 = vpop.f32.mrf.mxu0
        %v1096 = vadd.f32 %v1003, %v1095
        %1097 = vmatmul.f32.gmra.mxu0 %v1034
        %v1098 = vpop.f32.mrf.mxu0
        %v1099 = vadd.f32 %v1003, %v1098
        %1100 = vmatmul.f32.gmra.mxu0 %v1037
        %v1101 = vpop.f32.mrf.mxu0
        %v1102 = vadd.f32 %v1003, %v1101
        %1103 = vmatmul.f32.gmra.mxu0 %v1040
        %v1104 = vpop.f32.mrf.mxu0
        %v1105 = vadd.f32 %v1003, %v1104
        %1106 = vmatmul.f32.gmra.mxu0 %v1043
        %v1107 = vpop.f32.mrf.mxu0
        %v1108 = vadd.f32 %v1003, %v1107
        %1109 = vmatmul.f32.gmra.mxu0 %v1046
        %v1110 = vpop.f32.mrf.mxu0
        %v1111 = vadd.f32 %v1003, %v1110
        %1112 = vmatmul.f32.gmra.mxu0 %v1049
        %v1113 = vpop.f32.mrf.mxu0
        %v1114 = vadd.f32 %v1003, %v1113
        %1115 = vmatmul.f32.gmra.mxu0 %v1052
        %v1116 = vpop.f32.mrf.mxu0
        %v1117 = vadd.f32 %v1003, %v1116
        %1118 = vdwg.mxu0
        %v1119 = vmax.f32 %v1072, 0.0
        %v1120 = vmax.f32 %v1075, 0.0
        %v1121 = vmax.f32 %v1078, 0.0
        %v1122 = vmax.f32 %v1081, 0.0
        %v1123 = vmax.f32 %v1084, 0.0
        %v1124 = vmax.f32 %v1087, 0.0
        %v1125 = vmax.f32 %v1090, 0.0
        %v1126 = vmax.f32 %v1093, 0.0
        %v1127 = vmax.f32 %v1096, 0.0
        %v1128 = vmax.f32 %v1099, 0.0
        %v1129 = vmax.f32 %v1102, 0.0
        %v1130 = vmax.f32 %v1105, 0.0
        %v1131 = vmax.f32 %v1108, 0.0
        %v1132 = vmax.f32 %v1111, 0.0
        %v1133 = vmax.f32 %v1114, 0.0
        %v1134 = vmax.f32 %v1117, 0.0
        %v1135 = vld [vmem:[%s7] sm:$0x1]
        %v1137 = vperm.slane %v1135, 0
        %v1139 = vmul.f32 %v1119, %v1137
        %v1140 = vmul.f32 %v1120, %v1137
        %v1141 = vmul.f32 %v1121, %v1137
        %v1142 = vmul.f32 %v1122, %v1137
        %v1143 = vmul.f32 %v1123, %v1137
        %v1144 = vmul.f32 %v1124, %v1137
        %v1145 = vmul.f32 %v1125, %v1137
        %v1146 = vmul.f32 %v1126, %v1137
        %v1147 = vmul.f32 %v1127, %v1137
        %v1148 = vmul.f32 %v1128, %v1137
        %v1149 = vmul.f32 %v1129, %v1137
        %v1150 = vmul.f32 %v1130, %v1137
        %v1151 = vmul.f32 %v1131, %v1137
        %v1152 = vmul.f32 %v1132, %v1137
        %v1153 = vmul.f32 %v1133, %v1137
        %v1154 = vmul.f32 %v1134, %v1137
        %vm1155 = vcmask 64512
        %v1156 = vsel %vm1155, %v1139, 0.0
        %1157 = vadd.xlane.f32.xlu0 %v1156
        %v1158 = vpop.xlane.xlu0 %1157
        %v1159 = vsel %vm1155, %v1140, 0.0
        %1160 = vadd.xlane.f32.xlu0 %v1159
        %v1161 = vpop.xlane.xlu0 %1160
        %v1162 = vsel %vm1155, %v1141, 0.0
        %1163 = vadd.xlane.f32.xlu0 %v1162
        %v1164 = vpop.xlane.xlu0 %1163
        %v1165 = vsel %vm1155, %v1142, 0.0
        %1166 = vadd.xlane.f32.xlu0 %v1165
        %v1167 = vpop.xlane.xlu0 %1166
        %v1168 = vsel %vm1155, %v1143, 0.0
        %1169 = vadd.xlane.f32.xlu0 %v1168
        %v1170 = vpop.xlane.xlu0 %1169
        %v1171 = vsel %vm1155, %v1144, 0.0
        %1172 = vadd.xlane.f32.xlu0 %v1171
        %v1173 = vpop.xlane.xlu0 %1172
        %v1174 = vsel %vm1155, %v1145, 0.0
        %1175 = vadd.xlane.f32.xlu0 %v1174
        %v1176 = vpop.xlane.xlu0 %1175
        %v1177 = vsel %vm1155, %v1146, 0.0
        %1178 = vadd.xlane.f32.xlu0 %v1177
        %v1179 = vpop.xlane.xlu0 %1178
        %v1180 = vsel %vm1155, %v1147, 0.0
        %1181 = vadd.xlane.f32.xlu0 %v1180
        %v1182 = vpop.xlane.xlu0 %1181
        %v1183 = vsel %vm1155, %v1148, 0.0
        %1184 = vadd.xlane.f32.xlu0 %v1183
        %v1185 = vpop.xlane.xlu0 %1184
        %v1186 = vsel %vm1155, %v1149, 0.0
        %1187 = vadd.xlane.f32.xlu0 %v1186
        %v1188 = vpop.xlane.xlu0 %1187
        %v1189 = vsel %vm1155, %v1150, 0.0
        %1190 = vadd.xlane.f32.xlu0 %v1189
        %v1191 = vpop.xlane.xlu0 %1190
        %v1192 = vsel %vm1155, %v1151, 0.0
        %1193 = vadd.xlane.f32.xlu0 %v1192
        %v1194 = vpop.xlane.xlu0 %1193
        %v1195 = vsel %vm1155, %v1152, 0.0
        %1196 = vadd.xlane.f32.xlu0 %v1195
        %v1197 = vpop.xlane.xlu0 %1196
        %v1198 = vsel %vm1155, %v1153, 0.0
        %1199 = vadd.xlane.f32.xlu0 %v1198
        %v1200 = vpop.xlane.xlu0 %1199
        %v1201 = vsel %vm1155, %v1154, 0.0
        %1202 = vadd.xlane.f32.xlu0 %v1201
        %v1203 = vpop.xlane.xlu0 %1202
        %v1204 = vld [vmem:[#allocation2] sm:$0x1]
        %v1206 = vperm.slane %v1204, 0
        %v1208 = vadd.f32 %v1158, %v1206
        %v1209 = vadd.f32 %v1161, %v1206
        %v1210 = vadd.f32 %v1164, %v1206
        %v1211 = vadd.f32 %v1167, %v1206
        %v1212 = vadd.f32 %v1170, %v1206
        %v1213 = vadd.f32 %v1173, %v1206
        %v1214 = vadd.f32 %v1176, %v1206
        %v1215 = vadd.f32 %v1179, %v1206
        %v1216 = vadd.f32 %v1182, %v1206
        %v1217 = vadd.f32 %v1185, %v1206
        %v1218 = vadd.f32 %v1188, %v1206
        %v1219 = vadd.f32 %v1191, %v1206
        %v1220 = vadd.f32 %v1194, %v1206
        %v1221 = vadd.f32 %v1197, %v1206
        %v1222 = vadd.f32 %v1200, %v1206
        %v1223 = vadd.f32 %v1203, %v1206
        %1240 = vset.pattern.permute.xlu0 0
        %1241 = vperm.xlu0 %1240, %v1208
        %v1242 = vpop.permute.xlu0 %1241
        %1243 = vset.pattern.permute.xlu0 0
        %1244 = vperm.xlu0 %1243, %v1209
        %v1245 = vpop.permute.xlu0 %1244
        %1246 = vset.pattern.permute.xlu0 0
        %1247 = vperm.xlu0 %1246, %v1210
        %v1248 = vpop.permute.xlu0 %1247
        %1249 = vset.pattern.permute.xlu0 0
        %1250 = vperm.xlu0 %1249, %v1211
        %v1251 = vpop.permute.xlu0 %1250
        %1252 = vset.pattern.permute.xlu0 0
        %1253 = vperm.xlu0 %1252, %v1212
        %v1254 = vpop.permute.xlu0 %1253
        %1255 = vset.pattern.permute.xlu0 0
        %1256 = vperm.xlu0 %1255, %v1213
        %v1257 = vpop.permute.xlu0 %1256
        %1258 = vset.pattern.permute.xlu0 0
        %1259 = vperm.xlu0 %1258, %v1214
        %v1260 = vpop.permute.xlu0 %1259
        %1261 = vset.pattern.permute.xlu0 0
        %1262 = vperm.xlu0 %1261, %v1215
        %v1263 = vpop.permute.xlu0 %1262
        %1264 = vset.pattern.permute.xlu0 0
        %1265 = vperm.xlu0 %1264, %v1216
        %v1266 = vpop.permute.xlu0 %1265
        %1267 = vset.pattern.permute.xlu0 0
        %1268 = vperm.xlu0 %1267, %v1217
        %v1269 = vpop.permute.xlu0 %1268
        %1270 = vset.pattern.permute.xlu0 0
        %1271 = vperm.xlu0 %1270, %v1218
        %v1272 = vpop.permute.xlu0 %1271
        %1273 = vset.pattern.permute.xlu0 0
        %1274 = vperm.xlu0 %1273, %v1219
        %v1275 = vpop.permute.xlu0 %1274
        %1276 = vset.pattern.permute.xlu0 0
        %1277 = vperm.xlu0 %1276, %v1220
        %v1278 = vpop.permute.xlu0 %1277
        %1279 = vset.pattern.permute.xlu0 0
        %1280 = vperm.xlu0 %1279, %v1221
        %v1281 = vpop.permute.xlu0 %1280
        %1282 = vset.pattern.permute.xlu0 0
        %1283 = vperm.xlu0 %1282, %v1222
        %v1284 = vpop.permute.xlu0 %1283
        %1285 = vset.pattern.permute.xlu0 0
        %1286 = vperm.xlu0 %1285, %v1223
        %v1287 = vpop.permute.xlu0 %1286
        %v1288 = vlaneseq
        %v1289 = vand.u32 %v1288, 127
        %v1290 = vperm.slane %v1242, %v1289
        %v1291 = vadd.s32 %v1289, 4294967288
        %v1292 = vperm.slane %v1245, %v1291
        %vm1293 = vcmask 130112
        %v1294 = vsel %vm1293, %v1292, %v1290
        %v1295 = vadd.s32 %v1289, 4294967280
        %v1296 = vperm.slane %v1248, %v1295
        %vm1297 = vcmask 195712
        %v1298 = vsel %vm1297, %v1296, %v1294
        %v1299 = vadd.s32 %v1289, 4294967272
        %v1300 = vperm.slane %v1251, %v1299
        %vm1301 = vcmask 261312
        %v1302 = vsel %vm1301, %v1300, %v1298
        %v1303 = vadd.s32 %v1289, 4294967264
        %v1304 = vperm.slane %v1254, %v1303
        %vm1305 = vcmask 326912
        %v1306 = vsel %vm1305, %v1304, %v1302
        %v1307 = vadd.s32 %v1289, 4294967256
        %v1308 = vperm.slane %v1257, %v1307
        %vm1309 = vcmask 392512
        %v1310 = vsel %vm1309, %v1308, %v1306
        %v1311 = vadd.s32 %v1289, 4294967248
        %v1312 = vperm.slane %v1260, %v1311
        %vm1313 = vcmask 458112
        %v1314 = vsel %vm1313, %v1312, %v1310
        %v1315 = vadd.s32 %v1289, 4294967240
        %v1316 = vperm.slane %v1263, %v1315
        %vm1317 = vcmask 523712
        %v1318 = vsel %vm1317, %v1316, %v1314
        %v1319 = vadd.s32 %v1289, 4294967232
        %v1320 = vperm.slane %v1266, %v1319
        %vm1321 = vcmask 589312
        %v1322 = vsel %vm1321, %v1320, %v1318
        %v1323 = vadd.s32 %v1289, 4294967224
        %v1324 = vperm.slane %v1269, %v1323
        %vm1325 = vcmask 654912
        %v1326 = vsel %vm1325, %v1324, %v1322
        %v1327 = vadd.s32 %v1289, 4294967216
        %v1328 = vperm.slane %v1272, %v1327
        %vm1329 = vcmask 720512
        %v1330 = vsel %vm1329, %v1328, %v1326
        %v1331 = vadd.s32 %v1289, 4294967208
        %v1332 = vperm.slane %v1275, %v1331
        %vm1333 = vcmask 786112
        %v1334 = vsel %vm1333, %v1332, %v1330
        %v1335 = vadd.s32 %v1289, 4294967200
        %v1336 = vperm.slane %v1278, %v1335
        %vm1337 = vcmask 851712
        %v1338 = vsel %vm1337, %v1336, %v1334
        %v1339 = vadd.s32 %v1289, 4294967192
        %v1340 = vperm.slane %v1281, %v1339
        %vm1341 = vcmask 917312
        %v1342 = vsel %vm1341, %v1340, %v1338
        %v1343 = vadd.s32 %v1289, 4294967184
        %v1344 = vperm.slane %v1284, %v1343
        %vm1345 = vcmask 982912
        %v1346 = vsel %vm1345, %v1344, %v1342
        %v1347 = vadd.s32 %v1289, 4294967176
        %v1348 = vperm.slane %v1287, %v1347
        %vm1349 = vcmask 1048512
        %v1350 = vsel %vm1349, %v1348, %v1346
        %1352 = vst [vmem:[%s343] sm:$0x1] %v1350
        %s1353 = sand.u32 %s232, 1
        %s1354 = scalar_lea.sflag [#allocation4], %s1353
        %s1355 = sand.u32 %s232, 1
        %s1356 = scalar_lea.vmem [#allocation3], %s1355
        // Predicated region
        $region57: #{ged_matrix_forward.1} parent=55 // pred_check
          %p1357 = pneg %p242
        $region58: #{ged_matrix_forward.1} parent=55 // pred_check_branch
          %1359 = sbr.rel (%p1357) target = $region60
        $region59: #{ged_matrix_forward.1} parent=55 // pred_region
          %1361 = vsyncadd %s1354, 0
          %s1362 = scalar_lea.hbm %s9, %s25
          %s1364 = sshll.u32 %s1356, 4
          %s1365 = int_to_ptr.vmem [resolvable:$true] %s1364
          %s1366 = sshll.u32 %s1362, 4
          %s1367 = int_to_ptr.hbm [resolvable:$true] %s1366
          %1369 = dma.vmem_to_hbm [thread:$0]  %s1365, 16, %s1367, %s1354
        $region60: #{ged_matrix_forward.1} parent=55 // pred_fallthru
          _
      $region56: #{ged_matrix_forward.1} parent=5 // pred_fallthru
        _
      %p1370 = scmp.le.s32.totalorder 2, %s20
      // Predicated region
      $region61: #{ged_matrix_forward.1} parent=5 // pred_check
        %p1371 = pneg %p1370
      $region62: #{ged_matrix_forward.1} parent=5 // pred_check_branch
        %1373 = sbr.rel (%p1371) target = $region64
      $region63: #{ged_matrix_forward.1} parent=5 // pred_region
        %s1374 = ssub.s32 %s20, 2
        // Predicated region
        $region65: #{ged_matrix_forward.1} parent=63 // pred_check
          %p1375 = pneg %p248
        $region66: #{ged_matrix_forward.1} parent=63 // pred_check_branch
          %1377 = sbr.rel (%p1375) target = $region68
        $region67: #{ged_matrix_forward.1} parent=63 // pred_region
          %s1378 = sand.u32 %s233, 1
          %s1379 = scalar_lea.sflag [#allocation4], %s1378
          %s1380 = sand.u32 %s233, 1
          %s1381 = scalar_lea.vmem [#allocation3], %s1380
          %1383 = dma.done %s1379, 16
        $region68: #{ged_matrix_forward.1} parent=63 // pred_fallthru
          _
      $region64: #{ged_matrix_forward.1} parent=5 // pred_fallthru
        _
    $region6: #{ged_matrix_forward.1} parent=1 // loop_footer
      %s24 = sadd.s32 1, %s20
    $region7: #{ged_matrix_forward.1} parent=1 // loop_footer_branch
      %19 = sbr.rel target = $region3
    $region8: #{ged_matrix_forward.1} parent=1 // loop_exit
      _
    %1384 = vsyncpa [#allocation4], 1
    %s1385 = scalar_lea.sflag [#allocation4], 1
    %1386 = vsyncpa %s1385, 1

</llo_original>
